<compile_context>
chip_gen: v7x
topology: tpu7x:2x2x1
jax: 0.10.0
libtpu: 0.0.40
codegen_flags: <defaults>
</compile_context>

<pallas_src>
import jax
import jax.numpy as jnp
from jax.experimental import pallas as pl
from jax.experimental.pallas import tpu as pltpu


def _round_up(v: int, m: int) -> int:
    return (v + m - 1) // m * m


def _pad_to(a, shape):
    """Zero-pad `a` up to `shape` (no-op if already that shape)."""
    if tuple(a.shape) == tuple(shape):
        return a
    return jnp.zeros(shape, a.dtype).at[tuple(slice(0, s) for s in a.shape)].set(a)


def _fused_mlp_kernel(x_ref, w1_ref, b1_ref, w2_ref, b2_ref, o_ref):
    """One row tile through both pipeline 'stages' (Linear -> ReLU -> Linear)."""
    # Stage 0: x @ W1 + b1, ReLU.  Elementwise math kept in f32 (v5e: no bf16 VPU).
    h = jnp.dot(x_ref[...], w1_ref[...], preferred_element_type=jnp.float32)
    h = jnp.maximum(h + b1_ref[...].astype(jnp.float32), 0.0)
    # Stage 1: h @ W2 + b2.  Cast to weight dtype only at the MXU input.
    # NOTE: with bf16 weights this intentionally feeds bf16 activations to the MXU.
    y = jnp.dot(h.astype(w2_ref.dtype), w2_ref[...], preferred_element_type=jnp.float32)
    y = y + b2_ref[...].astype(jnp.float32)
    o_ref[...] = y.astype(o_ref.dtype)


def pipeline_parallel_forward(x, params, *, num_micro_batches: int, row_tile: int = 256):
    """Reproduces PipelineParallel.forward semantics on a single TPU.

    Splits `x` along dim 0 into `num_micro_batches` chunks (torch.chunk), runs
    the wrapped 2-layer MLP on every chunk, and returns the list of
    per-micro-batch results (what the PyTorch generator yields) plus the
    concatenated output.

    The Pallas grid iterates over hardware-sized row tiles (not micro-batches);
    micro-batch views are sliced from the concatenated result, which is
    numerically identical.
    """
    w1, b1, w2, b2 = params
    batch, d_in = x.shape
    d_hid = w1.shape[1]
    d_out = w2.shape[1]
    assert batch % num_micro_batches == 0, "batch must chunk evenly (torch.chunk)"
    micro = batch // num_micro_batches

    # ---- hardware-friendly padded geometry ---------------------------------
    lane = 128
    sublane = 8 if x.dtype == jnp.float32 else 16
    d_in_p = _round_up(d_in, lane)
    d_hid_p = _round_up(d_hid, lane)
    d_out_p = _round_up(d_out, lane)

    row_tile = max(sublane, _round_up(min(row_tile, _round_up(batch, sublane)), sublane))
    batch_p = _round_up(batch, row_tile)
    num_tiles = batch_p // row_tile

    x_p = _pad_to(x, (batch_p, d_in_p))
    w1_p = _pad_to(w1, (d_in_p, d_hid_p))
    b1_p = _pad_to(b1, (1, d_hid_p))
    w2_p = _pad_to(w2, (d_hid_p, d_out_p))
    b2_p = _pad_to(b2, (1, d_out_p))

    # ---- explicit VMEM budget & cost estimate ------------------------------
    act_itemsize = jnp.dtype(x.dtype).itemsize
    w_itemsize = jnp.dtype(w1.dtype).itemsize
    weight_bytes = (w1_p.size + b1_p.size + w2_p.size + b2_p.size) * w_itemsize
    act_bytes = 2 * row_tile * (d_in_p + d_out_p) * act_itemsize   # double-buffered x/out tiles
    inter_bytes = row_tile * d_hid_p * 4                            # f32 intermediate h
    needed = 2 * (weight_bytes + act_bytes + inter_bytes)           # generous margin
    vmem_limit = int(min(max(needed, 32 * 1024 * 1024), 64 * 1024 * 1024))  # fits v7x 64 MiB/TC

    flops = 2 * batch_p * d_in_p * d_hid_p + 2 * batch_p * d_hid_p * d_out_p
    bytes_accessed = int(x_p.size * act_itemsize + weight_bytes
                         + batch_p * d_out_p * act_itemsize)
    cost = pl.CostEstimate(flops=int(flops), transcendentals=0,
                           bytes_accessed=bytes_accessed)

    # Weights / biases: whole-array resident in VMEM (copied once, not
    # double-buffered per grid step).
    resident = pl.BlockSpec(memory_space=pltpu.MemorySpace.VMEM)

    grid_spec = pltpu.PrefetchScalarGridSpec(
        num_scalar_prefetch=0,
        grid=(num_tiles,),
        in_specs=[
            pl.BlockSpec((row_tile, d_in_p), lambda i: (i, 0)),  # row tile i of x
            resident,   # W1
            resident,   # b1
            resident,   # W2
            resident,   # b2
        ],
        # d_out_p is a multiple of 128 -> lane-dense, unmasked stores.
        out_specs=pl.BlockSpec((row_tile, d_out_p), lambda i: (i, 0)),
    )

    out_p = pl.pallas_call(
        _fused_mlp_kernel,
        out_shape=jax.ShapeDtypeStruct((batch_p, d_out_p), x.dtype),
        grid_spec=grid_spec,
        compiler_params=pltpu.CompilerParams(
            # Row tiles are independent -> parallel axis (shards across v7x's 2 TCs).
            dimension_semantics=("parallel",),
            vmem_limit_bytes=vmem_limit,
        ),
        cost_estimate=cost,
    )(x_p, w1_p, b1_p, w2_p, b2_p)

    # Strip padding, then slice the per-micro-batch views the PyTorch generator
    # would yield (as_completed ordering is a scheduling detail, not numerical).
    out = out_p[:batch, :d_out]
    micro_outputs = [out[i * micro:(i + 1) * micro] for i in range(num_micro_batches)]
    return micro_outputs, out

    # TODO(synk): torch.distributed.barrier / rpc.rpc_sync / ThreadPoolExecutor /
    # backward-redirection bookkeeping are distributed-runtime control flow with
    # no single-device tensor semantics; intentionally not modeled.


def init_params(d_in, d_hid, d_out, dtype=jnp.float32, key=None):
    """Deterministic parameter init (synthetic, no checkpoint)."""
    if key is None:
        key = jax.random.PRNGKey(0)
    k1, k2, k3, k4 = jax.random.split(key, 4)
    w1 = (jax.random.normal(k1, (d_in, d_hid), jnp.float32) / jnp.sqrt(d_in)).astype(dtype)
    b1 = (jax.random.normal(k2, (1, d_hid), jnp.float32) * 0.01).astype(dtype)
    w2 = (jax.random.normal(k3, (d_hid, d_out), jnp.float32) / jnp.sqrt(d_hid)).astype(dtype)
    b2 = (jax.random.normal(k4, (1, d_out), jnp.float32) * 0.01).astype(dtype)
    return w1, b1, w2, b2


if __name__ == "__main__":
    # Small but hardware-friendly shapes: 128-multiple feature dims (lane-dense
    # output), 512 rows -> two 256-row grid tiles, 4 micro-batches of 128 rows.
    batch, d_in, d_hid, d_out = 512, 128, 256, 128
    num_micro_batches = 4

    key = jax.random.PRNGKey(0)
    kx, kp = jax.random.split(key)
    x = jax.random.normal(kx, (batch, d_in), jnp.float32)
    params = init_params(d_in, d_hid, d_out, key=kp)

    micro_outs, out = pipeline_parallel_forward(
        x, params, num_micro_batches=num_micro_batches)
    out = jax.block_until_ready(out)

    # Reference check (pure JAX) — same math the wrapped module would do.
    w1, b1, w2, b2 = params
    h_ref = jnp.maximum(jnp.dot(x, w1, precision="highest") + b1, 0.0)
    ref = jnp.dot(h_ref, w2, precision="highest") + b2

    assert out.shape == (batch, d_out)
    assert len(micro_outs) == num_micro_batches
    assert all(mo.shape == (batch // num_micro_batches, d_out) for mo in micro_outs)
    assert bool(jnp.allclose(jnp.concatenate(micro_outs, axis=0), out))
    max_err = float(jnp.max(jnp.abs(out - ref)))
    assert max_err < 1e-3, f"max abs err {max_err}"

    print("KERNEL_OK")
</pallas_src>

<mosaic_0001>
module attributes {stable_mosaic.version = 11 : i64} {
  func.func @_fused_mlp_kernel(%arg0: i32, %arg1: memref<256x128xf32, #tpu.memory_space<vmem>>, %arg2: memref<128x256xf32, #tpu.memory_space<vmem>>, %arg3: memref<1x256xf32, #tpu.memory_space<vmem>>, %arg4: memref<256x128xf32, #tpu.memory_space<vmem>>, %arg5: memref<1x128xf32, #tpu.memory_space<vmem>>, %arg6: memref<256x128xf32, #tpu.memory_space<vmem>>) attributes {dimension_semantics = [#tpu.dimension_semantics<parallel>], iteration_bounds = array<i64: 2>, scalar_prefetch = 0 : i64, scratch_operands = 0 : i64, tpu.core_type = #tpu.core_type<tc>, window_params = [{transform_indices = @transform_0, window_bounds = array<i64: 256, 128>}, {pipeline_mode = #tpu.pipeline_mode<synchronous>, transform_indices = @transform_1, window_bounds = array<i64: 128, 256>}, {pipeline_mode = #tpu.pipeline_mode<synchronous>, transform_indices = @transform_2, window_bounds = array<i64: 1, 256>}, {pipeline_mode = #tpu.pipeline_mode<synchronous>, transform_indices = @transform_3, window_bounds = array<i64: 256, 128>}, {pipeline_mode = #tpu.pipeline_mode<synchronous>, transform_indices = @transform_4, window_bounds = array<i64: 1, 128>}, {transform_indices = @transform_5, window_bounds = array<i64: 256, 128>}]} {
    %c0 = arith.constant 0 : index
    %c0_0 = arith.constant 0 : index
    %0 = vector.load %arg1[%c0, %c0_0] : memref<256x128xf32, #tpu.memory_space<vmem>>, vector<256x128xf32>
    %c0_1 = arith.constant 0 : index
    %c0_2 = arith.constant 0 : index
    %1 = vector.load %arg2[%c0_1, %c0_2] : memref<128x256xf32, #tpu.memory_space<vmem>>, vector<128x256xf32>
    %cst = arith.constant dense<0.000000e+00> : vector<256x256xf32>
    %2 = tpu.matmul %0, %1, %cst {dimension_numbers = #tpu.dot_dimension_numbers<[1], [0], [0], [1], [0, 0, 1, 1], [], []>} : vector<256x128xf32>, vector<128x256xf32>, vector<256x256xf32> -> vector<256x256xf32>
    %c0_3 = arith.constant 0 : index
    %c0_4 = arith.constant 0 : index
    %3 = vector.load %arg3[%c0_3, %c0_4] : memref<1x256xf32, #tpu.memory_space<vmem>>, vector<1x256xf32>
    %4 = vector.broadcast %3 : vector<1x256xf32> to vector<256x256xf32>
    %5 = arith.addf %2, %4 : vector<256x256xf32>
    %cst_5 = arith.constant 0.000000e+00 : f32
    %6 = vector.broadcast %cst_5 : f32 to vector<256x256xf32>
    %7 = arith.maximumf %5, %6 : vector<256x256xf32>
    %c0_6 = arith.constant 0 : index
    %c0_7 = arith.constant 0 : index
    %8 = vector.load %arg4[%c0_6, %c0_7] : memref<256x128xf32, #tpu.memory_space<vmem>>, vector<256x128xf32>
    %cst_8 = arith.constant dense<0.000000e+00> : vector<256x128xf32>
    %9 = tpu.matmul %7, %8, %cst_8 {dimension_numbers = #tpu.dot_dimension_numbers<[1], [0], [0], [1], [0, 0, 1, 1], [], []>} : vector<256x256xf32>, vector<256x128xf32>, vector<256x128xf32> -> vector<256x128xf32>
    %c0_9 = arith.constant 0 : index
    %c0_10 = arith.constant 0 : index
    %10 = vector.load %arg5[%c0_9, %c0_10] : memref<1x128xf32, #tpu.memory_space<vmem>>, vector<1x128xf32>
    %11 = vector.broadcast %10 : vector<1x128xf32> to vector<256x128xf32>
    %12 = arith.addf %9, %11 : vector<256x128xf32>
    %c0_11 = arith.constant 0 : index
    %c0_12 = arith.constant 0 : index
    %13 = vector.load %arg6[%c0_11, %c0_12] : memref<256x128xf32, #tpu.memory_space<vmem>>, vector<256x128xf32>
    tpu.vector_store %arg6[%c0_11, %c0_12], %12 {strides = array<i32>} : memref<256x128xf32, #tpu.memory_space<vmem>>, vector<256x128xf32>,
    return
  }
  func.func @transform_0(%arg0: i32) -> (i32, i32) {
    %c0_i32 = arith.constant 0 : i32
    %c0_i32_0 = arith.constant 0 : i32
    return %arg0, %c0_i32 : i32, i32
  }
  func.func @transform_1(%arg0: i32) -> (i32, i32) {
    %c0_i32 = arith.constant 0 : i32
    %c0_i32_0 = arith.constant 0 : i32
    %c0_i32_1 = arith.constant 0 : i32
    return %c0_i32, %c0_i32_0 : i32, i32
  }
  func.func @transform_2(%arg0: i32) -> (i32, i32) {
    %c0_i32 = arith.constant 0 : i32
    %c0_i32_0 = arith.constant 0 : i32
    %c0_i32_1 = arith.constant 0 : i32
    return %c0_i32, %c0_i32_0 : i32, i32
  }
  func.func @transform_3(%arg0: i32) -> (i32, i32) {
    %c0_i32 = arith.constant 0 : i32
    %c0_i32_0 = arith.constant 0 : i32
    %c0_i32_1 = arith.constant 0 : i32
    return %c0_i32, %c0_i32_0 : i32, i32
  }
  func.func @transform_4(%arg0: i32) -> (i32, i32) {
    %c0_i32 = arith.constant 0 : i32
    %c0_i32_0 = arith.constant 0 : i32
    %c0_i32_1 = arith.constant 0 : i32
    return %c0_i32, %c0_i32_0 : i32, i32
  }
  func.func @transform_5(%arg0: i32) -> (i32, i32) {
    %c0_i32 = arith.constant 0 : i32
    %c0_i32_0 = arith.constant 0 : i32
    return %arg0, %c0_i32 : i32, i32
  }
}

</mosaic_0001>

<llo_original>
// kernel: tpu_custom_call.1
$region0: #{tpu_custom_call.1}
  #allocation0 [shape = 'u32[]', space=smem, size = 0x4, offset = 0x4, fixed_abs, tag = 'smem constant byte address 0x4 - core index']
  #allocation1 [shape = 'u32[144,128]{1,0:T(1,128)}', space=vmem, size = 0x12000, scoped, tag = 'internal scratch']
  %s0 = inlined_call_operand.hbm [shape: f32[512,128], index: 0, kind: input, shape index: {}]
  %s1 = inlined_call_operand.hbm [shape: f32[128,256], index: 1, kind: input, shape index: {}]
  %s2 = inlined_call_operand.vmem [shape: f32[1,256], index: 2, kind: input, shape index: {}]
  %s3 = inlined_call_operand.hbm [shape: f32[256,128], index: 3, kind: input, shape index: {}]
  %s4 = inlined_call_operand.vmem [shape: f32[1,128], index: 4, kind: input, shape index: {}]
  %s5 = inlined_call_operand.hbm [shape: f32[512,128], index: 5, kind: output, shape index: {}]
  %s6 = sld [smem:[#allocation0]]
  $region65: #{tpu_custom_call.1} parent=0
    _
  %s8 = ssub.s32 1, %s6
  %s9 = scalar_select 0, %s8, %s6
  $region1: #{tpu_custom_call.1} parent=0
    #allocation2 [shape = 'u8[262144]{0}', space=vmem, size = 0x40000, scoped, tag = 'input window, operand 0']
    #allocation3 [shape = 's32[2]{0}', space=sflag, size = 0x8, scoped, tag = 'scoped memory for tpu_custom_call.1']
    #allocation4 [shape = 's32[2]{0}', space=sflag, size = 0x8, scoped, tag = 'scoped memory for tpu_custom_call.1']
    #allocation5 [shape = 'u8[131072]{0}', space=vmem, size = 0x20000, scoped, tag = 'input window, operand 1, single buffered']
    #allocation6 [shape = 's32[1]{0}', space=sflag, size = 0x4, scoped, tag = 'scoped memory for tpu_custom_call.1']
    #allocation7 [shape = 'u8[131072]{0}', space=vmem, size = 0x20000, scoped, tag = 'input window, operand 3, single buffered']
    #allocation8 [shape = 'u8[262144]{0}', space=vmem, size = 0x40000, scoped, tag = 'output window, operand 0']
    %10 = vsyncpa [#allocation3], 0
    %s11 = scalar_lea.sflag [#allocation3], 1
    %12 = vsyncpa %s11, 0
    %13 = vsyncpa [#allocation6], 0
    %14 = vsyncpa [#allocation4], 0
    %s15 = scalar_lea.sflag [#allocation4], 1
    %16 = vsyncpa %s15, 0
    loop: start=0, step=1, limit=4
    $region2: #{tpu_custom_call.1} parent=1 // loop_pre_header
      _
    $region3: #{tpu_custom_call.1} parent=1 // loop_header
      %s18 = sphi 0, %s22
      %p19 = scmp.ge.s32.totalorder %s18, 4
      %s28 = sphi 0, %s30
      %s31 = sphi 0, %s28
      %s32 = sphi 0, %s31
      %s48 = sphi 0, %s32
      %s52 = sphi 0, %s52
      %s54 = sphi 0, %s52
      %s55 = sphi 0, %s54
      %s69 = sphi 0, %s55
      %s73 = sphi 0, %s73
      %s75 = sphi 0, %s73
      %s76 = sphi 0, %s75
      %s90 = sphi 0, %s76
      %s94 = sphi 0, %s94
      %s96 = sphi 0, %s94
      %s97 = sphi 0, %s96
      %s111 = sphi 0, %s97
      %s115 = sphi 0, %s115
      %s117 = sphi 0, %s115
      %s118 = sphi 0, %s117
      %s132 = sphi 0, %s118
      %s138 = sphi 0, %s140
      %s141 = sphi 0, %s138
      %s142 = sphi 0, %s141
      %s158 = sphi 0, %s142
    $region4: #{tpu_custom_call.1} parent=1 // loop_header_branch
      %21 = sbr.rel (%p19) target = $region8
    $region5: #{tpu_custom_call.1} parent=1 // loop_body
      %s23 = ssub.s32 %s18, 1
      %s24 = ssub.s32 %s18, 2
      %s25 = sadd.s32 %s18, 1
      %s26 = ssub.s32 %s18, %s25
      %p27 = scmp.eq.s32.totalorder %s26, 0
      %s29 = sadd.s32 %s28, 1
      %s30 = scalar_select %p27, %s28, %s29
      %p33 = pneg %p27
      %p34 = scmp.eq.s32.totalorder %s18, 1
      %p35 = por %p33, %p34
      %p36 = scmp.ne.s32.totalorder %s28, %s31
      %p37 = scmp.eq.s32.totalorder %s18, 0
      %p38 = por %p36, %p37
      %p39 = scmp.ne.s32.totalorder %s28, %s31
      %p40 = scmp.eq.s32.totalorder %s23, 1
      %p41 = por %p39, %p40
      %p42 = scmp.ne.s32.totalorder %s31, %s32
      %p43 = scmp.eq.s32.totalorder %s23, 0
      %p44 = por %p42, %p43
      %p45 = scmp.ne.s32.totalorder %s31, %s32
      %p46 = scmp.eq.s32.totalorder %s24, 1
      %p47 = por %p45, %p46
      %p49 = scmp.ne.s32.totalorder %s32, %s48
      %p50 = scmp.eq.s32.totalorder %s24, 0
      %p51 = por %p49, %p50
      %s53 = sadd.s32 %s52, 1
      %p56 = scmp.eq.s32.totalorder %s18, 1
      %p57 = scmp.ne.s32.totalorder %s52, %s54
      %p58 = scmp.eq.s32.totalorder %s18, 0
      %p59 = por %p57, %p58
      %p60 = scmp.ne.s32.totalorder %s52, %s54
      %p61 = scmp.eq.s32.totalorder %s23, 1
      %p62 = por %p60, %p61
      %p63 = scmp.ne.s32.totalorder %s54, %s55
      %p64 = scmp.eq.s32.totalorder %s23, 0
      %p65 = por %p63, %p64
      %p66 = scmp.ne.s32.totalorder %s54, %s55
      %p67 = scmp.eq.s32.totalorder %s24, 1
      %p68 = por %p66, %p67
      %p70 = scmp.ne.s32.totalorder %s55, %s69
      %p71 = scmp.eq.s32.totalorder %s24, 0
      %p72 = por %p70, %p71
      %s74 = sadd.s32 %s73, 1
      %p77 = scmp.eq.s32.totalorder %s18, 1
      %p78 = scmp.ne.s32.totalorder %s73, %s75
      %p79 = scmp.eq.s32.totalorder %s18, 0
      %p80 = por %p78, %p79
      %p81 = scmp.ne.s32.totalorder %s73, %s75
      %p82 = scmp.eq.s32.totalorder %s23, 1
      %p83 = por %p81, %p82
      %p84 = scmp.ne.s32.totalorder %s75, %s76
      %p85 = scmp.eq.s32.totalorder %s23, 0
      %p86 = por %p84, %p85
      %p87 = scmp.ne.s32.totalorder %s75, %s76
      %p88 = scmp.eq.s32.totalorder %s24, 1
      %p89 = por %p87, %p88
      %p91 = scmp.ne.s32.totalorder %s76, %s90
      %p92 = scmp.eq.s32.totalorder %s24, 0
      %p93 = por %p91, %p92
      %s95 = sadd.s32 %s94, 1
      %p98 = scmp.eq.s32.totalorder %s18, 1
      %p99 = scmp.ne.s32.totalorder %s94, %s96
      %p100 = scmp.eq.s32.totalorder %s18, 0
      %p101 = por %p99, %p100
      %p102 = scmp.ne.s32.totalorder %s94, %s96
      %p103 = scmp.eq.s32.totalorder %s23, 1
      %p104 = por %p102, %p103
      %p105 = scmp.ne.s32.totalorder %s96, %s97
      %p106 = scmp.eq.s32.totalorder %s23, 0
      %p107 = por %p105, %p106
      %p108 = scmp.ne.s32.totalorder %s96, %s97
      %p109 = scmp.eq.s32.totalorder %s24, 1
      %p110 = por %p108, %p109
      %p112 = scmp.ne.s32.totalorder %s97, %s111
      %p113 = scmp.eq.s32.totalorder %s24, 0
      %p114 = por %p112, %p113
      %s116 = sadd.s32 %s115, 1
      %p119 = scmp.eq.s32.totalorder %s18, 1
      %p120 = scmp.ne.s32.totalorder %s115, %s117
      %p121 = scmp.eq.s32.totalorder %s18, 0
      %p122 = por %p120, %p121
      %p123 = scmp.ne.s32.totalorder %s115, %s117
      %p124 = scmp.eq.s32.totalorder %s23, 1
      %p125 = por %p123, %p124
      %p126 = scmp.ne.s32.totalorder %s117, %s118
      %p127 = scmp.eq.s32.totalorder %s23, 0
      %p128 = por %p126, %p127
      %p129 = scmp.ne.s32.totalorder %s117, %s118
      %p130 = scmp.eq.s32.totalorder %s24, 1
      %p131 = por %p129, %p130
      %p133 = scmp.ne.s32.totalorder %s118, %s132
      %p134 = scmp.eq.s32.totalorder %s24, 0
      %p135 = por %p133, %p134
      %s136 = ssub.s32 %s18, %s25
      %p137 = scmp.eq.s32.totalorder %s136, 0
      %s139 = sadd.s32 %s138, 1
      %s140 = scalar_select %p137, %s138, %s139
      %p143 = pneg %p137
      %p144 = scmp.eq.s32.totalorder %s18, 1
      %p145 = por %p143, %p144
      %p146 = scmp.ne.s32.totalorder %s138, %s141
      %p147 = scmp.eq.s32.totalorder %s18, 0
      %p148 = por %p146, %p147
      %p149 = scmp.ne.s32.totalorder %s138, %s141
      %p150 = scmp.eq.s32.totalorder %s23, 1
      %p151 = por %p149, %p150
      %p152 = scmp.ne.s32.totalorder %s141, %s142
      %p153 = scmp.eq.s32.totalorder %s23, 0
      %p154 = por %p152, %p153
      %p155 = scmp.ne.s32.totalorder %s141, %s142
      %p156 = scmp.eq.s32.totalorder %s24, 1
      %p157 = por %p155, %p156
      %p159 = scmp.ne.s32.totalorder %s142, %s158
      %p160 = scmp.eq.s32.totalorder %s24, 0
      %p161 = por %p159, %p160
      %p162 = scmp.le.s32.totalorder 1, %s18
      %p163 = scmp.lt.s32.totalorder %s18, 3
      %p164 = pnand %p162, %p163
      %p165 = pneg %p164
      // Predicated region
      $region9: #{tpu_custom_call.1} parent=5 // pred_check
        _
      $region10: #{tpu_custom_call.1} parent=5 // pred_check_branch
        %167 = sbr.rel (%p164) target = $region12
      $region11: #{tpu_custom_call.1} parent=5 // pred_region
        %s168 = ssub.s32 %s18, 1
        // Predicated region
        $region13: #{tpu_custom_call.1} parent=11 // pred_check
          %p169 = pneg %p65
        $region14: #{tpu_custom_call.1} parent=11 // pred_check_branch
          %171 = sbr.rel (%p169) target = $region16
        $region15: #{tpu_custom_call.1} parent=11 // pred_region
          %s173 = ssub.s32 4096, 4096
          %174 = vsyncadd [#allocation6], %s173
          %s175 = sshll.u32 [#allocation5], 4
          %s176 = int_to_ptr.vmem [resolvable:$true] %s175
          %181 = dma.hbm_to_vmem [thread:$0]  %s1, 4096, %s176, [#allocation6], 256, 256, 16
        $region16: #{tpu_custom_call.1} parent=11 // pred_fallthru
          _
        // Predicated region
        $region17: #{tpu_custom_call.1} parent=11 // pred_check
          %p182 = pneg %p86
        $region18: #{tpu_custom_call.1} parent=11 // pred_check_branch
          %184 = sbr.rel (%p182) target = $region20
        $region19: #{tpu_custom_call.1} parent=11 // pred_region
          _
        $region20: #{tpu_custom_call.1} parent=11 // pred_fallthru
          _
        // Predicated region
        $region21: #{tpu_custom_call.1} parent=11 // pred_check
          %p185 = pneg %p107
        $region22: #{tpu_custom_call.1} parent=11 // pred_check_branch
          %187 = sbr.rel (%p185) target = $region24
        $region23: #{tpu_custom_call.1} parent=11 // pred_region
          %s189 = ssub.s32 4096, 4096
          %190 = vsyncadd [#allocation6], %s189
          %s191 = sshll.u32 [#allocation7], 4
          %s192 = int_to_ptr.vmem [resolvable:$true] %s191
          %197 = dma.hbm_to_vmem [thread:$0]  %s3, 4096, %s192, [#allocation6], 128, 128, 8
        $region24: #{tpu_custom_call.1} parent=11 // pred_fallthru
          _
        // Predicated region
        $region25: #{tpu_custom_call.1} parent=11 // pred_check
          %p198 = pneg %p128
        $region26: #{tpu_custom_call.1} parent=11 // pred_check_branch
          %200 = sbr.rel (%p198) target = $region28
        $region27: #{tpu_custom_call.1} parent=11 // pred_region
          _
        $region28: #{tpu_custom_call.1} parent=11 // pred_fallthru
          _
      $region12: #{tpu_custom_call.1} parent=5 // pred_fallthru
        _
      %p201 = scmp.lt.s32.totalorder %s18, 2
      // Predicated region
      $region29: #{tpu_custom_call.1} parent=5 // pred_check
        %p202 = pneg %p201
      $region30: #{tpu_custom_call.1} parent=5 // pred_check_branch
        %204 = sbr.rel (%p202) target = $region32
      $region31: #{tpu_custom_call.1} parent=5 // pred_region
        // Predicated region
        $region33: #{tpu_custom_call.1} parent=31 // pred_check
          %p205 = pneg %p38
        $region34: #{tpu_custom_call.1} parent=31 // pred_check_branch
          %207 = sbr.rel (%p205) target = $region36
        $region35: #{tpu_custom_call.1} parent=31 // pred_region
          %s208 = sand.u32 %s28, 1
          %s209 = scalar_lea.sflag [#allocation3], %s208
          %s210 = sand.u32 %s28, 1
          %s211 = smul.addr %s210, 256
          %s212 = scalar_lea.vmem [#allocation2], %s211
          %s213 = smul.u32 32, %s18
          %s215 = ssub.s32 4096, 4096
          %216 = vsyncadd %s209, %s215
          %s217 = smul.addr %s213, 128
          %s218 = scalar_lea.hbm %s0, %s217
          %s219 = sshll.u32 %s212, 4
          %s220 = int_to_ptr.vmem [resolvable:$true] %s219
          %225 = dma.hbm_to_vmem [thread:$0]  %s218, 4096, %s220, %s209, 128, 128, 8
        $region36: #{tpu_custom_call.1} parent=31 // pred_fallthru
          _
      $region32: #{tpu_custom_call.1} parent=5 // pred_fallthru
        _
      %p226 = scmp.le.s32.totalorder 1, %s18
      %p227 = scmp.lt.s32.totalorder %s18, 3
      %p228 = pnand %p226, %p227
      %p229 = pneg %p228
      // Predicated region
      $region37: #{tpu_custom_call.1} parent=5 // pred_check
        _
      $region38: #{tpu_custom_call.1} parent=5 // pred_check_branch
        %231 = sbr.rel (%p228) target = $region40
      $region39: #{tpu_custom_call.1} parent=5 // pred_region
        %s232 = ssub.s32 %s18, 1
        %s233 = sand.u32 %s31, 1
        %s234 = scalar_lea.sflag [#allocation3], %s233
        %s235 = sand.u32 %s31, 1
        %s236 = smul.addr %s235, 256
        %s237 = scalar_lea.vmem [#allocation2], %s236
        // Predicated region
        $region41: #{tpu_custom_call.1} parent=39 // pred_check
          %p238 = pneg %p44
        $region42: #{tpu_custom_call.1} parent=39 // pred_check_branch
          %240 = sbr.rel (%p238) target = $region44
        $region43: #{tpu_custom_call.1} parent=39 // pred_region
          %241 = dma.done %s234, 4096
        $region44: #{tpu_custom_call.1} parent=39 // pred_fallthru
          _
        // Predicated region
        $region45: #{tpu_custom_call.1} parent=39 // pred_check
          %p242 = pneg %p65
        $region46: #{tpu_custom_call.1} parent=39 // pred_check_branch
          %244 = sbr.rel (%p242) target = $region48
        $region47: #{tpu_custom_call.1} parent=39 // pred_region
          %245 = dma.done [#allocation6], 4096
        $region48: #{tpu_custom_call.1} parent=39 // pred_fallthru
          _
        // Predicated region
        $region49: #{tpu_custom_call.1} parent=39 // pred_check
          %p246 = pneg %p107
        $region50: #{tpu_custom_call.1} parent=39 // pred_check_branch
          %248 = sbr.rel (%p246) target = $region52
        $region51: #{tpu_custom_call.1} parent=39 // pred_region
          %249 = dma.done [#allocation6], 4096
        $region52: #{tpu_custom_call.1} parent=39 // pred_fallthru
          _
        %s250 = sand.u32 %s31, 1
        %s251 = scalar_lea.sflag [#allocation3], %s250
        %s252 = sand.u32 %s31, 1
        %s253 = smul.addr %s252, 256
        %s254 = scalar_lea.vmem [#allocation2], %s253
        %p255 = pneg %p44
        %p256 = pneg %p41
        %p257 = pneg %p65
        %p258 = pneg %p62
        %p259 = pneg %p86
        %p260 = pneg %p83
        %p261 = pneg %p107
        %p262 = pneg %p104
        %p263 = pneg %p128
        %p264 = pneg %p125
        %p265 = pneg %p154
        %p266 = pneg %p151
        %s267 = sand.u32 %s141, 1
        %s268 = scalar_lea.sflag [#allocation4], %s267
        %s269 = sand.u32 %s141, 1
        %s270 = smul.addr %s269, 256
        %s271 = scalar_lea.vmem [#allocation8], %s270
        %s272 = smul.u32 32, %s23
        %s273 = smul.u32 32, %s23
        %v274 = vld [vmem:[%s237] sm:$0xff]
        %v275 = vld [vmem:[%s237 + $0x8] sm:$0xff]
        %v276 = vld [vmem:[%s237 + $0x10] sm:$0xff]
        %v277 = vld [vmem:[%s237 + $0x18] sm:$0xff]
        %v278 = vld [vmem:[%s237 + $0x20] sm:$0xff]
        %v279 = vld [vmem:[%s237 + $0x28] sm:$0xff]
        %v280 = vld [vmem:[%s237 + $0x30] sm:$0xff]
        %v281 = vld [vmem:[%s237 + $0x38] sm:$0xff]
        %v282 = vld [vmem:[%s237 + $0x40] sm:$0xff]
        %v283 = vld [vmem:[%s237 + $0x48] sm:$0xff]
        %v284 = vld [vmem:[%s237 + $0x50] sm:$0xff]
        %v285 = vld [vmem:[%s237 + $0x58] sm:$0xff]
        %v286 = vld [vmem:[%s237 + $0x60] sm:$0xff]
        %v287 = vld [vmem:[%s237 + $0x68] sm:$0xff]
        %v288 = vld [vmem:[%s237 + $0x70] sm:$0xff]
        %v289 = vld [vmem:[%s237 + $0x78] sm:$0xff]
        %v290 = vld [vmem:[%s237 + $0x80] sm:$0xff]
        %v291 = vld [vmem:[%s237 + $0x88] sm:$0xff]
        %v292 = vld [vmem:[%s237 + $0x90] sm:$0xff]
        %v293 = vld [vmem:[%s237 + $0x98] sm:$0xff]
        %v294 = vld [vmem:[%s237 + $0xa0] sm:$0xff]
        %v295 = vld [vmem:[%s237 + $0xa8] sm:$0xff]
        %v296 = vld [vmem:[%s237 + $0xb0] sm:$0xff]
        %v297 = vld [vmem:[%s237 + $0xb8] sm:$0xff]
        %v298 = vld [vmem:[%s237 + $0xc0] sm:$0xff]
        %v299 = vld [vmem:[%s237 + $0xc8] sm:$0xff]
        %v300 = vld [vmem:[%s237 + $0xd0] sm:$0xff]
        %v301 = vld [vmem:[%s237 + $0xd8] sm:$0xff]
        %v302 = vld [vmem:[%s237 + $0xe0] sm:$0xff]
        %v303 = vld [vmem:[%s237 + $0xe8] sm:$0xff]
        %v304 = vld [vmem:[%s237 + $0xf0] sm:$0xff]
        %v305 = vld [vmem:[%s237 + $0xf8] sm:$0xff]
        %v306 = vld [vmem:[#allocation5] sm:$0xff]
        %v307 = vld [vmem:[#allocation5 + $0x8] sm:$0xff]
        %v308 = vld [vmem:[#allocation5 + $0x10] sm:$0xff]
        %v309 = vld [vmem:[#allocation5 + $0x18] sm:$0xff]
        %v310 = vld [vmem:[#allocation5 + $0x20] sm:$0xff]
        %v311 = vld [vmem:[#allocation5 + $0x28] sm:$0xff]
        %v312 = vld [vmem:[#allocation5 + $0x30] sm:$0xff]
        %v313 = vld [vmem:[#allocation5 + $0x38] sm:$0xff]
        %v314 = vld [vmem:[#allocation5 + $0x40] sm:$0xff]
        %v315 = vld [vmem:[#allocation5 + $0x48] sm:$0xff]
        %v316 = vld [vmem:[#allocation5 + $0x50] sm:$0xff]
        %v317 = vld [vmem:[#allocation5 + $0x58] sm:$0xff]
        %v318 = vld [vmem:[#allocation5 + $0x60] sm:$0xff]
        %v319 = vld [vmem:[#allocation5 + $0x68] sm:$0xff]
        %v320 = vld [vmem:[#allocation5 + $0x70] sm:$0xff]
        %v321 = vld [vmem:[#allocation5 + $0x78] sm:$0xff]
        %v322 = vld [vmem:[#allocation5 + $0x80] sm:$0xff]
        %v323 = vld [vmem:[#allocation5 + $0x88] sm:$0xff]
        %v324 = vld [vmem:[#allocation5 + $0x90] sm:$0xff]
        %v325 = vld [vmem:[#allocation5 + $0x98] sm:$0xff]
        %v326 = vld [vmem:[#allocation5 + $0xa0] sm:$0xff]
        %v327 = vld [vmem:[#allocation5 + $0xa8] sm:$0xff]
        %v328 = vld [vmem:[#allocation5 + $0xb0] sm:$0xff]
        %v329 = vld [vmem:[#allocation5 + $0xb8] sm:$0xff]
        %v330 = vld [vmem:[#allocation5 + $0xc0] sm:$0xff]
        %v331 = vld [vmem:[#allocation5 + $0xc8] sm:$0xff]
        %v332 = vld [vmem:[#allocation5 + $0xd0] sm:$0xff]
        %v333 = vld [vmem:[#allocation5 + $0xd8] sm:$0xff]
        %v334 = vld [vmem:[#allocation5 + $0xe0] sm:$0xff]
        %v335 = vld [vmem:[#allocation5 + $0xe8] sm:$0xff]
        %v336 = vld [vmem:[#allocation5 + $0xf0] sm:$0xff]
        %v337 = vld [vmem:[#allocation5 + $0xf8] sm:$0xff]
        %v338 = vld [vmem:[%s2] sm:$0x3]
        %v340 = vlaneseq
        %v341 = vshrl.u32 %v340, 7
        %v342 = vsub.s32 0, %v341
        %v343 = vrot.slane %v338, %v342
        %v344 = vlaneseq
        %v345 = vshrl.u32 %v344, 7
        %v346 = vsub.s32 1, %v345
        %v347 = vrot.slane %v338, %v346
        %350 = vmatprep.subr.mxu0 %v307
        %351 = vmatpush1.msra.mxu0 %v306
        %352 = vmatprep.subr.mxu0 %v309
        %353 = vmatpush1.msra.mxu0 %v308
        %354 = vmatprep.subr.mxu0 %v311
        %355 = vmatpush1.msra.mxu0 %v310
        %356 = vmatprep.subr.mxu0 %v313
        %357 = vmatpush1.msra.mxu0 %v312
        %358 = vmatprep.subr.mxu0 %v315
        %359 = vmatpush1.msra.mxu0 %v314
        %360 = vmatprep.subr.mxu0 %v317
        %361 = vmatpush1.msra.mxu0 %v316
        %362 = vmatprep.subr.mxu0 %v319
        %363 = vmatpush1.msra.mxu0 %v318
        %364 = vmatprep.subr.mxu0 %v321
        %365 = vmatpush1.msra.mxu0 %v320
        %366 = vmatprep.subr.mxu0 %v323
        %367 = vmatpush1.msra.mxu0 %v322
        %368 = vmatprep.subr.mxu0 %v325
        %369 = vmatpush1.msra.mxu0 %v324
        %370 = vmatprep.subr.mxu0 %v327
        %371 = vmatpush1.msra.mxu0 %v326
        %372 = vmatprep.subr.mxu0 %v329
        %373 = vmatpush1.msra.mxu0 %v328
        %374 = vmatprep.subr.mxu0 %v331
        %375 = vmatpush1.msra.mxu0 %v330
        %376 = vmatprep.subr.mxu0 %v333
        %377 = vmatpush1.msra.mxu0 %v332
        %378 = vmatprep.subr.mxu0 %v335
        %379 = vmatpush1.msra.mxu0 %v334
        %380 = vmatprep.subr.mxu0 %v337
        %381 = vmatpush1.msra.mxu0 %v336
        %382 = vmatprep.subr.mxu0 0.0
        %383 = vmatpush1.msra.mxu0 0.0
        %384 = vmatprep.subr.mxu0 0.0
        %385 = vmatpush1.msra.mxu0 0.0
        %386 = vmatprep.subr.mxu0 0.0
        %387 = vmatpush1.msra.mxu0 0.0
        %388 = vmatprep.subr.mxu0 0.0
        %389 = vmatpush1.msra.mxu0 0.0
        %390 = vmatprep.subr.mxu0 0.0
        %391 = vmatpush1.msra.mxu0 0.0
        %392 = vmatprep.subr.mxu0 0.0
        %393 = vmatpush1.msra.mxu0 0.0
        %394 = vmatprep.subr.mxu0 0.0
        %395 = vmatpush1.msra.mxu0 0.0
        %396 = vmatprep.subr.mxu0 0.0
        %397 = vmatpush1.msra.mxu0 0.0
        %398 = vmatprep.subr.mxu0 0.0
        %399 = vmatpush1.msra.mxu0 0.0
        %400 = vmatprep.subr.mxu0 0.0
        %401 = vmatpush1.msra.mxu0 0.0
        %402 = vmatprep.subr.mxu0 0.0
        %403 = vmatpush1.msra.mxu0 0.0
        %404 = vmatprep.subr.mxu0 0.0
        %405 = vmatpush1.msra.mxu0 0.0
        %406 = vmatprep.subr.mxu0 0.0
        %407 = vmatpush1.msra.mxu0 0.0
        %408 = vmatprep.subr.mxu0 0.0
        %409 = vmatpush1.msra.mxu0 0.0
        %410 = vmatprep.subr.mxu0 0.0
        %411 = vmatpush1.msra.mxu0 0.0
        %412 = vmatprep.subr.mxu0 0.0
        %413 = vmatpush1.msra.mxu0 0.0
        %414 = vmatprep.mubr.f32.mxu0 0.0
        %415 = vmatmul.mubr.f32.gmra.mrb[0].mxu0 %v274
        %v416 = vpop.f32.mrb[0].mxu0
        %v417 = vadd.f32 %v343, %v416
        %v418 = vpop.f32.mrb[0].mxu0
        %v419 = vadd.f32 %v347, %v418
        %420 = vmatprep.mubr.f32.mxu0 0.0
        %421 = vmatmul.mubr.f32.gmra.mrb[0].mxu0 %v275
        %v422 = vpop.f32.mrb[0].mxu0
        %v423 = vadd.f32 %v343, %v422
        %v424 = vpop.f32.mrb[0].mxu0
        %v425 = vadd.f32 %v347, %v424
        %426 = vmatprep.mubr.f32.mxu0 0.0
        %427 = vmatmul.mubr.f32.gmra.mrb[0].mxu0 %v276
        %v428 = vpop.f32.mrb[0].mxu0
        %v429 = vadd.f32 %v343, %v428
        %v430 = vpop.f32.mrb[0].mxu0
        %v431 = vadd.f32 %v347, %v430
        %432 = vmatprep.mubr.f32.mxu0 0.0
        %433 = vmatmul.mubr.f32.gmra.mrb[0].mxu0 %v277
        %v434 = vpop.f32.mrb[0].mxu0
        %v435 = vadd.f32 %v343, %v434
        %v436 = vpop.f32.mrb[0].mxu0
        %v437 = vadd.f32 %v347, %v436
        %438 = vmatprep.mubr.f32.mxu0 0.0
        %439 = vmatmul.mubr.f32.gmra.mrb[0].mxu0 %v278
        %v440 = vpop.f32.mrb[0].mxu0
        %v441 = vadd.f32 %v343, %v440
        %v442 = vpop.f32.mrb[0].mxu0
        %v443 = vadd.f32 %v347, %v442
        %444 = vmatprep.mubr.f32.mxu0 0.0
        %445 = vmatmul.mubr.f32.gmra.mrb[0].mxu0 %v279
        %v446 = vpop.f32.mrb[0].mxu0
        %v447 = vadd.f32 %v343, %v446
        %v448 = vpop.f32.mrb[0].mxu0
        %v449 = vadd.f32 %v347, %v448
        %450 = vmatprep.mubr.f32.mxu0 0.0
        %451 = vmatmul.mubr.f32.gmra.mrb[0].mxu0 %v280
        %v452 = vpop.f32.mrb[0].mxu0
        %v453 = vadd.f32 %v343, %v452
        %v454 = vpop.f32.mrb[0].mxu0
        %v455 = vadd.f32 %v347, %v454
        %456 = vmatprep.mubr.f32.mxu0 0.0
        %457 = vmatmul.mubr.f32.gmra.mrb[0].mxu0 %v281
        %v458 = vpop.f32.mrb[0].mxu0
        %v459 = vadd.f32 %v343, %v458
        %v460 = vpop.f32.mrb[0].mxu0
        %v461 = vadd.f32 %v347, %v460
        %462 = vmatprep.mubr.f32.mxu0 0.0
        %463 = vmatmul.mubr.f32.gmra.mrb[0].mxu0 %v282
        %v464 = vpop.f32.mrb[0].mxu0
        %v465 = vadd.f32 %v343, %v464
        %v466 = vpop.f32.mrb[0].mxu0
        %v467 = vadd.f32 %v347, %v466
        %468 = vmatprep.mubr.f32.mxu0 0.0
        %469 = vmatmul.mubr.f32.gmra.mrb[0].mxu0 %v283
        %v470 = vpop.f32.mrb[0].mxu0
        %v471 = vadd.f32 %v343, %v470
        %v472 = vpop.f32.mrb[0].mxu0
        %v473 = vadd.f32 %v347, %v472
        %474 = vmatprep.mubr.f32.mxu0 0.0
        %475 = vmatmul.mubr.f32.gmra.mrb[0].mxu0 %v284
        %v476 = vpop.f32.mrb[0].mxu0
        %v477 = vadd.f32 %v343, %v476
        %v478 = vpop.f32.mrb[0].mxu0
        %v479 = vadd.f32 %v347, %v478
        %480 = vmatprep.mubr.f32.mxu0 0.0
        %481 = vmatmul.mubr.f32.gmra.mrb[0].mxu0 %v285
        %v482 = vpop.f32.mrb[0].mxu0
        %v483 = vadd.f32 %v343, %v482
        %v484 = vpop.f32.mrb[0].mxu0
        %v485 = vadd.f32 %v347, %v484
        %486 = vmatprep.mubr.f32.mxu0 0.0
        %487 = vmatmul.mubr.f32.gmra.mrb[0].mxu0 %v286
        %v488 = vpop.f32.mrb[0].mxu0
        %v489 = vadd.f32 %v343, %v488
        %v490 = vpop.f32.mrb[0].mxu0
        %v491 = vadd.f32 %v347, %v490
        %492 = vmatprep.mubr.f32.mxu0 0.0
        %493 = vmatmul.mubr.f32.gmra.mrb[0].mxu0 %v287
        %v494 = vpop.f32.mrb[0].mxu0
        %v495 = vadd.f32 %v343, %v494
        %v496 = vpop.f32.mrb[0].mxu0
        %v497 = vadd.f32 %v347, %v496
        %498 = vmatprep.mubr.f32.mxu0 0.0
        %499 = vmatmul.mubr.f32.gmra.mrb[0].mxu0 %v288
        %v500 = vpop.f32.mrb[0].mxu0
        %v501 = vadd.f32 %v343, %v500
        %v502 = vpop.f32.mrb[0].mxu0
        %v503 = vadd.f32 %v347, %v502
        %504 = vmatprep.mubr.f32.mxu0 0.0
        %505 = vmatmul.mubr.f32.gmra.mrb[0].mxu0 %v289
        %v506 = vpop.f32.mrb[0].mxu0
        %v507 = vadd.f32 %v343, %v506
        %v508 = vpop.f32.mrb[0].mxu0
        %v509 = vadd.f32 %v347, %v508
        %510 = vmatprep.mubr.f32.mxu0 0.0
        %511 = vmatmul.mubr.f32.gmra.mrb[0].mxu0 %v290
        %v512 = vpop.f32.mrb[0].mxu0
        %v513 = vadd.f32 %v343, %v512
        %v514 = vpop.f32.mrb[0].mxu0
        %v515 = vadd.f32 %v347, %v514
        %516 = vmatprep.mubr.f32.mxu0 0.0
        %517 = vmatmul.mubr.f32.gmra.mrb[0].mxu0 %v291
        %v518 = vpop.f32.mrb[0].mxu0
        %v519 = vadd.f32 %v343, %v518
        %v520 = vpop.f32.mrb[0].mxu0
        %v521 = vadd.f32 %v347, %v520
        %522 = vmatprep.mubr.f32.mxu0 0.0
        %523 = vmatmul.mubr.f32.gmra.mrb[0].mxu0 %v292
        %v524 = vpop.f32.mrb[0].mxu0
        %v525 = vadd.f32 %v343, %v524
        %v526 = vpop.f32.mrb[0].mxu0
        %v527 = vadd.f32 %v347, %v526
        %528 = vmatprep.mubr.f32.mxu0 0.0
        %529 = vmatmul.mubr.f32.gmra.mrb[0].mxu0 %v293
        %v530 = vpop.f32.mrb[0].mxu0
        %v531 = vadd.f32 %v343, %v530
        %v532 = vpop.f32.mrb[0].mxu0
        %v533 = vadd.f32 %v347, %v532
        %534 = vmatprep.mubr.f32.mxu0 0.0
        %535 = vmatmul.mubr.f32.gmra.mrb[0].mxu0 %v294
        %v536 = vpop.f32.mrb[0].mxu0
        %v537 = vadd.f32 %v343, %v536
        %v538 = vpop.f32.mrb[0].mxu0
        %v539 = vadd.f32 %v347, %v538
        %540 = vmatprep.mubr.f32.mxu0 0.0
        %541 = vmatmul.mubr.f32.gmra.mrb[0].mxu0 %v295
        %v542 = vpop.f32.mrb[0].mxu0
        %v543 = vadd.f32 %v343, %v542
        %v544 = vpop.f32.mrb[0].mxu0
        %v545 = vadd.f32 %v347, %v544
        %546 = vmatprep.mubr.f32.mxu0 0.0
        %547 = vmatmul.mubr.f32.gmra.mrb[0].mxu0 %v296
        %v548 = vpop.f32.mrb[0].mxu0
        %v549 = vadd.f32 %v343, %v548
        %v550 = vpop.f32.mrb[0].mxu0
        %v551 = vadd.f32 %v347, %v550
        %552 = vmatprep.mubr.f32.mxu0 0.0
        %553 = vmatmul.mubr.f32.gmra.mrb[0].mxu0 %v297
        %v554 = vpop.f32.mrb[0].mxu0
        %v555 = vadd.f32 %v343, %v554
        %v556 = vpop.f32.mrb[0].mxu0
        %v557 = vadd.f32 %v347, %v556
        %558 = vmatprep.mubr.f32.mxu0 0.0
        %559 = vmatmul.mubr.f32.gmra.mrb[0].mxu0 %v298
        %v560 = vpop.f32.mrb[0].mxu0
        %v561 = vadd.f32 %v343, %v560
        %v562 = vpop.f32.mrb[0].mxu0
        %v563 = vadd.f32 %v347, %v562
        %564 = vmatprep.mubr.f32.mxu0 0.0
        %565 = vmatmul.mubr.f32.gmra.mrb[0].mxu0 %v299
        %v566 = vpop.f32.mrb[0].mxu0
        %v567 = vadd.f32 %v343, %v566
        %v568 = vpop.f32.mrb[0].mxu0
        %v569 = vadd.f32 %v347, %v568
        %570 = vmatprep.mubr.f32.mxu0 0.0
        %571 = vmatmul.mubr.f32.gmra.mrb[0].mxu0 %v300
        %v572 = vpop.f32.mrb[0].mxu0
        %v573 = vadd.f32 %v343, %v572
        %v574 = vpop.f32.mrb[0].mxu0
        %v575 = vadd.f32 %v347, %v574
        %576 = vmatprep.mubr.f32.mxu0 0.0
        %577 = vmatmul.mubr.f32.gmra.mrb[0].mxu0 %v301
        %v578 = vpop.f32.mrb[0].mxu0
        %v579 = vadd.f32 %v343, %v578
        %v580 = vpop.f32.mrb[0].mxu0
        %v581 = vadd.f32 %v347, %v580
        %582 = vmatprep.mubr.f32.mxu0 0.0
        %583 = vmatmul.mubr.f32.gmra.mrb[0].mxu0 %v302
        %v584 = vpop.f32.mrb[0].mxu0
        %v585 = vadd.f32 %v343, %v584
        %v586 = vpop.f32.mrb[0].mxu0
        %v587 = vadd.f32 %v347, %v586
        %588 = vmatprep.mubr.f32.mxu0 0.0
        %589 = vmatmul.mubr.f32.gmra.mrb[0].mxu0 %v303
        %v590 = vpop.f32.mrb[0].mxu0
        %v591 = vadd.f32 %v343, %v590
        %v592 = vpop.f32.mrb[0].mxu0
        %v593 = vadd.f32 %v347, %v592
        %594 = vmatprep.mubr.f32.mxu0 0.0
        %595 = vmatmul.mubr.f32.gmra.mrb[0].mxu0 %v304
        %v596 = vpop.f32.mrb[0].mxu0
        %v597 = vadd.f32 %v343, %v596
        %v598 = vpop.f32.mrb[0].mxu0
        %v599 = vadd.f32 %v347, %v598
        %600 = vmatprep.mubr.f32.mxu0 0.0
        %601 = vmatmul.mubr.f32.gmra.mrb[0].mxu0 %v305
        %v602 = vpop.f32.mrb[0].mxu0
        %v603 = vadd.f32 %v343, %v602
        %v604 = vpop.f32.mrb[0].mxu0
        %v605 = vadd.f32 %v347, %v604
        %606 = vdwg.mxu0
        %v607 = vmax.f32 %v417, 0.0
        %v608 = vmax.f32 %v419, 0.0
        %v609 = vmax.f32 %v423, 0.0
        %v610 = vmax.f32 %v425, 0.0
        %v611 = vmax.f32 %v429, 0.0
        %v612 = vmax.f32 %v431, 0.0
        %v613 = vmax.f32 %v435, 0.0
        %v614 = vmax.f32 %v437, 0.0
        %v615 = vmax.f32 %v441, 0.0
        %v616 = vmax.f32 %v443, 0.0
        %v617 = vmax.f32 %v447, 0.0
        %v618 = vmax.f32 %v449, 0.0
        %v619 = vmax.f32 %v453, 0.0
        %v620 = vmax.f32 %v455, 0.0
        %v621 = vmax.f32 %v459, 0.0
        %v622 = vmax.f32 %v461, 0.0
        %v623 = vmax.f32 %v465, 0.0
        %v624 = vmax.f32 %v467, 0.0
        %v625 = vmax.f32 %v471, 0.0
        %v626 = vmax.f32 %v473, 0.0
        %v627 = vmax.f32 %v477, 0.0
        %v628 = vmax.f32 %v479, 0.0
        %v629 = vmax.f32 %v483, 0.0
        %v630 = vmax.f32 %v485, 0.0
        %v631 = vmax.f32 %v489, 0.0
        %v632 = vmax.f32 %v491, 0.0
        %v633 = vmax.f32 %v495, 0.0
        %v634 = vmax.f32 %v497, 0.0
        %v635 = vmax.f32 %v501, 0.0
        %v636 = vmax.f32 %v503, 0.0
        %v637 = vmax.f32 %v507, 0.0
        %v638 = vmax.f32 %v509, 0.0
        %v639 = vmax.f32 %v513, 0.0
        %v640 = vmax.f32 %v515, 0.0
        %v641 = vmax.f32 %v519, 0.0
        %v642 = vmax.f32 %v521, 0.0
        %v643 = vmax.f32 %v525, 0.0
        %v644 = vmax.f32 %v527, 0.0
        %v645 = vmax.f32 %v531, 0.0
        %v646 = vmax.f32 %v533, 0.0
        %v647 = vmax.f32 %v537, 0.0
        %v648 = vmax.f32 %v539, 0.0
        %v649 = vmax.f32 %v543, 0.0
        %v650 = vmax.f32 %v545, 0.0
        %v651 = vmax.f32 %v549, 0.0
        %v652 = vmax.f32 %v551, 0.0
        %v653 = vmax.f32 %v555, 0.0
        %v654 = vmax.f32 %v557, 0.0
        %v655 = vmax.f32 %v561, 0.0
        %v656 = vmax.f32 %v563, 0.0
        %v657 = vmax.f32 %v567, 0.0
        %v658 = vmax.f32 %v569, 0.0
        %v659 = vmax.f32 %v573, 0.0
        %v660 = vmax.f32 %v575, 0.0
        %v661 = vmax.f32 %v579, 0.0
        %v662 = vmax.f32 %v581, 0.0
        %v663 = vmax.f32 %v585, 0.0
        %v664 = vmax.f32 %v587, 0.0
        %v665 = vmax.f32 %v591, 0.0
        %v666 = vmax.f32 %v593, 0.0
        %v667 = vmax.f32 %v597, 0.0
        %v668 = vmax.f32 %v599, 0.0
        %v669 = vmax.f32 %v603, 0.0
        %v670 = vmax.f32 %v605, 0.0
        %v671 = vld [vmem:[#allocation7] sm:$0xff]
        %v672 = vld [vmem:[#allocation7 + $0x8] sm:$0xff]
        %v673 = vld [vmem:[#allocation7 + $0x10] sm:$0xff]
        %v674 = vld [vmem:[#allocation7 + $0x18] sm:$0xff]
        %v675 = vld [vmem:[#allocation7 + $0x20] sm:$0xff]
        %v676 = vld [vmem:[#allocation7 + $0x28] sm:$0xff]
        %v677 = vld [vmem:[#allocation7 + $0x30] sm:$0xff]
        %v678 = vld [vmem:[#allocation7 + $0x38] sm:$0xff]
        %v679 = vld [vmem:[#allocation7 + $0x40] sm:$0xff]
        %v680 = vld [vmem:[#allocation7 + $0x48] sm:$0xff]
        %v681 = vld [vmem:[#allocation7 + $0x50] sm:$0xff]
        %v682 = vld [vmem:[#allocation7 + $0x58] sm:$0xff]
        %v683 = vld [vmem:[#allocation7 + $0x60] sm:$0xff]
        %v684 = vld [vmem:[#allocation7 + $0x68] sm:$0xff]
        %v685 = vld [vmem:[#allocation7 + $0x70] sm:$0xff]
        %v686 = vld [vmem:[#allocation7 + $0x78] sm:$0xff]
        %v687 = vld [vmem:[#allocation7 + $0x80] sm:$0xff]
        %v688 = vld [vmem:[#allocation7 + $0x88] sm:$0xff]
        %v689 = vld [vmem:[#allocation7 + $0x90] sm:$0xff]
        %v690 = vld [vmem:[#allocation7 + $0x98] sm:$0xff]
        %v691 = vld [vmem:[#allocation7 + $0xa0] sm:$0xff]
        %v692 = vld [vmem:[#allocation7 + $0xa8] sm:$0xff]
        %v693 = vld [vmem:[#allocation7 + $0xb0] sm:$0xff]
        %v694 = vld [vmem:[#allocation7 + $0xb8] sm:$0xff]
        %v695 = vld [vmem:[#allocation7 + $0xc0] sm:$0xff]
        %v696 = vld [vmem:[#allocation7 + $0xc8] sm:$0xff]
        %v697 = vld [vmem:[#allocation7 + $0xd0] sm:$0xff]
        %v698 = vld [vmem:[#allocation7 + $0xd8] sm:$0xff]
        %v699 = vld [vmem:[#allocation7 + $0xe0] sm:$0xff]
        %v700 = vld [vmem:[#allocation7 + $0xe8] sm:$0xff]
        %v701 = vld [vmem:[#allocation7 + $0xf0] sm:$0xff]
        %v702 = vld [vmem:[#allocation7 + $0xf8] sm:$0xff]
        %v703 = vld [vmem:[%s4] sm:$0x1]
        %v705 = vlaneseq
        %v706 = vshrl.u32 %v705, 7
        %v707 = vsub.s32 0, %v706
        %v708 = vrot.slane %v703, %v707
        %710 = vmatprep.subr.mxu0 0.0
        %711 = vmatpush1.msra.mxu0 %v671
        %712 = vmatprep.subr.mxu0 0.0
        %713 = vmatpush1.msra.mxu0 %v672
        %714 = vmatprep.subr.mxu0 0.0
        %715 = vmatpush1.msra.mxu0 %v673
        %716 = vmatprep.subr.mxu0 0.0
        %717 = vmatpush1.msra.mxu0 %v674
        %718 = vmatprep.subr.mxu0 0.0
        %719 = vmatpush1.msra.mxu0 %v675
        %720 = vmatprep.subr.mxu0 0.0
        %721 = vmatpush1.msra.mxu0 %v676
        %722 = vmatprep.subr.mxu0 0.0
        %723 = vmatpush1.msra.mxu0 %v677
        %724 = vmatprep.subr.mxu0 0.0
        %725 = vmatpush1.msra.mxu0 %v678
        %726 = vmatprep.subr.mxu0 0.0
        %727 = vmatpush1.msra.mxu0 %v679
        %728 = vmatprep.subr.mxu0 0.0
        %729 = vmatpush1.msra.mxu0 %v680
        %730 = vmatprep.subr.mxu0 0.0
        %731 = vmatpush1.msra.mxu0 %v681
        %732 = vmatprep.subr.mxu0 0.0
        %733 = vmatpush1.msra.mxu0 %v682
        %734 = vmatprep.subr.mxu0 0.0
        %735 = vmatpush1.msra.mxu0 %v683
        %736 = vmatprep.subr.mxu0 0.0
        %737 = vmatpush1.msra.mxu0 %v684
        %738 = vmatprep.subr.mxu0 0.0
        %739 = vmatpush1.msra.mxu0 %v685
        %740 = vmatprep.subr.mxu0 0.0
        %741 = vmatpush1.msra.mxu0 %v686
        %742 = vmatprep.subr.mxu0 0.0
        %743 = vmatpush1.msra.mxu0 %v687
        %744 = vmatprep.subr.mxu0 0.0
        %745 = vmatpush1.msra.mxu0 %v688
        %746 = vmatprep.subr.mxu0 0.0
        %747 = vmatpush1.msra.mxu0 %v689
        %748 = vmatprep.subr.mxu0 0.0
        %749 = vmatpush1.msra.mxu0 %v690
        %750 = vmatprep.subr.mxu0 0.0
        %751 = vmatpush1.msra.mxu0 %v691
        %752 = vmatprep.subr.mxu0 0.0
        %753 = vmatpush1.msra.mxu0 %v692
        %754 = vmatprep.subr.mxu0 0.0
        %755 = vmatpush1.msra.mxu0 %v693
        %756 = vmatprep.subr.mxu0 0.0
        %757 = vmatpush1.msra.mxu0 %v694
        %758 = vmatprep.subr.mxu0 0.0
        %759 = vmatpush1.msra.mxu0 %v695
        %760 = vmatprep.subr.mxu0 0.0
        %761 = vmatpush1.msra.mxu0 %v696
        %762 = vmatprep.subr.mxu0 0.0
        %763 = vmatpush1.msra.mxu0 %v697
        %764 = vmatprep.subr.mxu0 0.0
        %765 = vmatpush1.msra.mxu0 %v698
        %766 = vmatprep.subr.mxu0 0.0
        %767 = vmatpush1.msra.mxu0 %v699
        %768 = vmatprep.subr.mxu0 0.0
        %769 = vmatpush1.msra.mxu0 %v700
        %770 = vmatprep.subr.mxu0 0.0
        %771 = vmatpush1.msra.mxu0 %v701
        %772 = vmatprep.subr.mxu0 0.0
        %773 = vmatpush1.msra.mxu0 %v702
        %774 = vmatprep.mubr.f32.mxu0 %v608
        %775 = vmatmul.mubr.f32.gmra.mrb[0].mxu0 %v607
        %v776 = vpop.f32.mrb[0].mxu0
        %v777 = vadd.f32 %v708, %v776
        %v778 = vpop.f32.mrb[0].mxu0
        %779 = vmatprep.mubr.f32.mxu0 %v610
        %780 = vmatmul.mubr.f32.gmra.mrb[0].mxu0 %v609
        %v781 = vpop.f32.mrb[0].mxu0
        %v782 = vadd.f32 %v708, %v781
        %v783 = vpop.f32.mrb[0].mxu0
        %784 = vmatprep.mubr.f32.mxu0 %v612
        %785 = vmatmul.mubr.f32.gmra.mrb[0].mxu0 %v611
        %v786 = vpop.f32.mrb[0].mxu0
        %v787 = vadd.f32 %v708, %v786
        %v788 = vpop.f32.mrb[0].mxu0
        %789 = vmatprep.mubr.f32.mxu0 %v614
        %790 = vmatmul.mubr.f32.gmra.mrb[0].mxu0 %v613
        %v791 = vpop.f32.mrb[0].mxu0
        %v792 = vadd.f32 %v708, %v791
        %v793 = vpop.f32.mrb[0].mxu0
        %794 = vmatprep.mubr.f32.mxu0 %v616
        %795 = vmatmul.mubr.f32.gmra.mrb[0].mxu0 %v615
        %v796 = vpop.f32.mrb[0].mxu0
        %v797 = vadd.f32 %v708, %v796
        %v798 = vpop.f32.mrb[0].mxu0
        %799 = vmatprep.mubr.f32.mxu0 %v618
        %800 = vmatmul.mubr.f32.gmra.mrb[0].mxu0 %v617
        %v801 = vpop.f32.mrb[0].mxu0
        %v802 = vadd.f32 %v708, %v801
        %v803 = vpop.f32.mrb[0].mxu0
        %804 = vmatprep.mubr.f32.mxu0 %v620
        %805 = vmatmul.mubr.f32.gmra.mrb[0].mxu0 %v619
        %v806 = vpop.f32.mrb[0].mxu0
        %v807 = vadd.f32 %v708, %v806
        %v808 = vpop.f32.mrb[0].mxu0
        %809 = vmatprep.mubr.f32.mxu0 %v622
        %810 = vmatmul.mubr.f32.gmra.mrb[0].mxu0 %v621
        %v811 = vpop.f32.mrb[0].mxu0
        %v812 = vadd.f32 %v708, %v811
        %v813 = vpop.f32.mrb[0].mxu0
        %814 = vmatprep.mubr.f32.mxu0 %v624
        %815 = vmatmul.mubr.f32.gmra.mrb[0].mxu0 %v623
        %v816 = vpop.f32.mrb[0].mxu0
        %v817 = vadd.f32 %v708, %v816
        %v818 = vpop.f32.mrb[0].mxu0
        %819 = vmatprep.mubr.f32.mxu0 %v626
        %820 = vmatmul.mubr.f32.gmra.mrb[0].mxu0 %v625
        %v821 = vpop.f32.mrb[0].mxu0
        %v822 = vadd.f32 %v708, %v821
        %v823 = vpop.f32.mrb[0].mxu0
        %824 = vmatprep.mubr.f32.mxu0 %v628
        %825 = vmatmul.mubr.f32.gmra.mrb[0].mxu0 %v627
        %v826 = vpop.f32.mrb[0].mxu0
        %v827 = vadd.f32 %v708, %v826
        %v828 = vpop.f32.mrb[0].mxu0
        %829 = vmatprep.mubr.f32.mxu0 %v630
        %830 = vmatmul.mubr.f32.gmra.mrb[0].mxu0 %v629
        %v831 = vpop.f32.mrb[0].mxu0
        %v832 = vadd.f32 %v708, %v831
        %v833 = vpop.f32.mrb[0].mxu0
        %834 = vmatprep.mubr.f32.mxu0 %v632
        %835 = vmatmul.mubr.f32.gmra.mrb[0].mxu0 %v631
        %v836 = vpop.f32.mrb[0].mxu0
        %v837 = vadd.f32 %v708, %v836
        %v838 = vpop.f32.mrb[0].mxu0
        %839 = vmatprep.mubr.f32.mxu0 %v634
        %840 = vmatmul.mubr.f32.gmra.mrb[0].mxu0 %v633
        %v841 = vpop.f32.mrb[0].mxu0
        %v842 = vadd.f32 %v708, %v841
        %v843 = vpop.f32.mrb[0].mxu0
        %844 = vmatprep.mubr.f32.mxu0 %v636
        %845 = vmatmul.mubr.f32.gmra.mrb[0].mxu0 %v635
        %v846 = vpop.f32.mrb[0].mxu0
        %v847 = vadd.f32 %v708, %v846
        %v848 = vpop.f32.mrb[0].mxu0
        %849 = vmatprep.mubr.f32.mxu0 %v638
        %850 = vmatmul.mubr.f32.gmra.mrb[0].mxu0 %v637
        %v851 = vpop.f32.mrb[0].mxu0
        %v852 = vadd.f32 %v708, %v851
        %v853 = vpop.f32.mrb[0].mxu0
        %854 = vmatprep.mubr.f32.mxu0 %v640
        %855 = vmatmul.mubr.f32.gmra.mrb[0].mxu0 %v639
        %v856 = vpop.f32.mrb[0].mxu0
        %v857 = vadd.f32 %v708, %v856
        %v858 = vpop.f32.mrb[0].mxu0
        %859 = vmatprep.mubr.f32.mxu0 %v642
        %860 = vmatmul.mubr.f32.gmra.mrb[0].mxu0 %v641
        %v861 = vpop.f32.mrb[0].mxu0
        %v862 = vadd.f32 %v708, %v861
        %v863 = vpop.f32.mrb[0].mxu0
        %864 = vmatprep.mubr.f32.mxu0 %v644
        %865 = vmatmul.mubr.f32.gmra.mrb[0].mxu0 %v643
        %v866 = vpop.f32.mrb[0].mxu0
        %v867 = vadd.f32 %v708, %v866
        %v868 = vpop.f32.mrb[0].mxu0
        %869 = vmatprep.mubr.f32.mxu0 %v646
        %870 = vmatmul.mubr.f32.gmra.mrb[0].mxu0 %v645
        %v871 = vpop.f32.mrb[0].mxu0
        %v872 = vadd.f32 %v708, %v871
        %v873 = vpop.f32.mrb[0].mxu0
        %874 = vmatprep.mubr.f32.mxu0 %v648
        %875 = vmatmul.mubr.f32.gmra.mrb[0].mxu0 %v647
        %v876 = vpop.f32.mrb[0].mxu0
        %v877 = vadd.f32 %v708, %v876
        %v878 = vpop.f32.mrb[0].mxu0
        %879 = vmatprep.mubr.f32.mxu0 %v650
        %880 = vmatmul.mubr.f32.gmra.mrb[0].mxu0 %v649
        %v881 = vpop.f32.mrb[0].mxu0
        %v882 = vadd.f32 %v708, %v881
        %v883 = vpop.f32.mrb[0].mxu0
        %884 = vmatprep.mubr.f32.mxu0 %v652
        %885 = vmatmul.mubr.f32.gmra.mrb[0].mxu0 %v651
        %v886 = vpop.f32.mrb[0].mxu0
        %v887 = vadd.f32 %v708, %v886
        %v888 = vpop.f32.mrb[0].mxu0
        %889 = vmatprep.mubr.f32.mxu0 %v654
        %890 = vmatmul.mubr.f32.gmra.mrb[0].mxu0 %v653
        %v891 = vpop.f32.mrb[0].mxu0
        %v892 = vadd.f32 %v708, %v891
        %v893 = vpop.f32.mrb[0].mxu0
        %894 = vmatprep.mubr.f32.mxu0 %v656
        %895 = vmatmul.mubr.f32.gmra.mrb[0].mxu0 %v655
        %v896 = vpop.f32.mrb[0].mxu0
        %v897 = vadd.f32 %v708, %v896
        %v898 = vpop.f32.mrb[0].mxu0
        %899 = vmatprep.mubr.f32.mxu0 %v658
        %900 = vmatmul.mubr.f32.gmra.mrb[0].mxu0 %v657
        %v901 = vpop.f32.mrb[0].mxu0
        %v902 = vadd.f32 %v708, %v901
        %v903 = vpop.f32.mrb[0].mxu0
        %904 = vmatprep.mubr.f32.mxu0 %v660
        %905 = vmatmul.mubr.f32.gmra.mrb[0].mxu0 %v659
        %v906 = vpop.f32.mrb[0].mxu0
        %v907 = vadd.f32 %v708, %v906
        %v908 = vpop.f32.mrb[0].mxu0
        %909 = vmatprep.mubr.f32.mxu0 %v662
        %910 = vmatmul.mubr.f32.gmra.mrb[0].mxu0 %v661
        %v911 = vpop.f32.mrb[0].mxu0
        %v912 = vadd.f32 %v708, %v911
        %v913 = vpop.f32.mrb[0].mxu0
        %914 = vmatprep.mubr.f32.mxu0 %v664
        %915 = vmatmul.mubr.f32.gmra.mrb[0].mxu0 %v663
        %v916 = vpop.f32.mrb[0].mxu0
        %v917 = vadd.f32 %v708, %v916
        %v918 = vpop.f32.mrb[0].mxu0
        %919 = vmatprep.mubr.f32.mxu0 %v666
        %920 = vmatmul.mubr.f32.gmra.mrb[0].mxu0 %v665
        %v921 = vpop.f32.mrb[0].mxu0
        %v922 = vadd.f32 %v708, %v921
        %v923 = vpop.f32.mrb[0].mxu0
        %924 = vmatprep.mubr.f32.mxu0 %v668
        %925 = vmatmul.mubr.f32.gmra.mrb[0].mxu0 %v667
        %v926 = vpop.f32.mrb[0].mxu0
        %v927 = vadd.f32 %v708, %v926
        %v928 = vpop.f32.mrb[0].mxu0
        %929 = vmatprep.mubr.f32.mxu0 %v670
        %930 = vmatmul.mubr.f32.gmra.mrb[0].mxu0 %v669
        %v931 = vpop.f32.mrb[0].mxu0
        %v932 = vadd.f32 %v708, %v931
        %v933 = vpop.f32.mrb[0].mxu0
        %934 = vdwg.mxu0
        %935 = vst [vmem:[%s271] sm:$0xff] %v777
        %936 = vst [vmem:[%s271 + $0x8] sm:$0xff] %v782
        %937 = vst [vmem:[%s271 + $0x10] sm:$0xff] %v787
        %938 = vst [vmem:[%s271 + $0x18] sm:$0xff] %v792
        %939 = vst [vmem:[%s271 + $0x20] sm:$0xff] %v797
        %940 = vst [vmem:[%s271 + $0x28] sm:$0xff] %v802
        %941 = vst [vmem:[%s271 + $0x30] sm:$0xff] %v807
        %942 = vst [vmem:[%s271 + $0x38] sm:$0xff] %v812
        %943 = vst [vmem:[%s271 + $0x40] sm:$0xff] %v817
        %944 = vst [vmem:[%s271 + $0x48] sm:$0xff] %v822
        %945 = vst [vmem:[%s271 + $0x50] sm:$0xff] %v827
        %946 = vst [vmem:[%s271 + $0x58] sm:$0xff] %v832
        %947 = vst [vmem:[%s271 + $0x60] sm:$0xff] %v837
        %948 = vst [vmem:[%s271 + $0x68] sm:$0xff] %v842
        %949 = vst [vmem:[%s271 + $0x70] sm:$0xff] %v847
        %950 = vst [vmem:[%s271 + $0x78] sm:$0xff] %v852
        %951 = vst [vmem:[%s271 + $0x80] sm:$0xff] %v857
        %952 = vst [vmem:[%s271 + $0x88] sm:$0xff] %v862
        %953 = vst [vmem:[%s271 + $0x90] sm:$0xff] %v867
        %954 = vst [vmem:[%s271 + $0x98] sm:$0xff] %v872
        %955 = vst [vmem:[%s271 + $0xa0] sm:$0xff] %v877
        %956 = vst [vmem:[%s271 + $0xa8] sm:$0xff] %v882
        %957 = vst [vmem:[%s271 + $0xb0] sm:$0xff] %v887
        %958 = vst [vmem:[%s271 + $0xb8] sm:$0xff] %v892
        %959 = vst [vmem:[%s271 + $0xc0] sm:$0xff] %v897
        %960 = vst [vmem:[%s271 + $0xc8] sm:$0xff] %v902
        %961 = vst [vmem:[%s271 + $0xd0] sm:$0xff] %v907
        %962 = vst [vmem:[%s271 + $0xd8] sm:$0xff] %v912
        %963 = vst [vmem:[%s271 + $0xe0] sm:$0xff] %v917
        %964 = vst [vmem:[%s271 + $0xe8] sm:$0xff] %v922
        %965 = vst [vmem:[%s271 + $0xf0] sm:$0xff] %v927
        %966 = vst [vmem:[%s271 + $0xf8] sm:$0xff] %v932
        %s967 = sand.u32 %s141, 1
        %s968 = scalar_lea.sflag [#allocation4], %s967
        %s969 = sand.u32 %s141, 1
        %s970 = smul.addr %s969, 256
        %s971 = scalar_lea.vmem [#allocation8], %s970
        // Predicated region
        $region53: #{tpu_custom_call.1} parent=39 // pred_check
          %p972 = pneg %p151
        $region54: #{tpu_custom_call.1} parent=39 // pred_check_branch
          %974 = sbr.rel (%p972) target = $region56
        $region55: #{tpu_custom_call.1} parent=39 // pred_region
          %s975 = smul.u32 32, %s23
          %s977 = ssub.s32 4096, 4096
          %978 = vsyncadd %s968, %s977
          %s979 = smul.addr %s975, 128
          %s980 = scalar_lea.hbm %s5, %s979
          %s981 = sshll.u32 %s971, 4
          %s982 = int_to_ptr.vmem [resolvable:$true] %s981
          %987 = dma.vmem_to_hbm [thread:$0]  %s982, 4096, %s980, %s968, 128, 128, 8
        $region56: #{tpu_custom_call.1} parent=39 // pred_fallthru
          _
      $region40: #{tpu_custom_call.1} parent=5 // pred_fallthru
        _
      %p988 = scmp.le.s32.totalorder 2, %s18
      // Predicated region
      $region57: #{tpu_custom_call.1} parent=5 // pred_check
        %p989 = pneg %p988
      $region58: #{tpu_custom_call.1} parent=5 // pred_check_branch
        %991 = sbr.rel (%p989) target = $region60
      $region59: #{tpu_custom_call.1} parent=5 // pred_region
        %s992 = ssub.s32 %s18, 2
        // Predicated region
        $region61: #{tpu_custom_call.1} parent=59 // pred_check
          %p993 = pneg %p157
        $region62: #{tpu_custom_call.1} parent=59 // pred_check_branch
          %995 = sbr.rel (%p993) target = $region64
        $region63: #{tpu_custom_call.1} parent=59 // pred_region
          %s996 = sand.u32 %s142, 1
          %s997 = scalar_lea.sflag [#allocation4], %s996
          %s998 = sand.u32 %s142, 1
          %s999 = smul.addr %s998, 256
          %s1000 = scalar_lea.vmem [#allocation8], %s999
          %1001 = dma.done %s997, 4096
        $region64: #{tpu_custom_call.1} parent=59 // pred_fallthru
          _
      $region60: #{tpu_custom_call.1} parent=5 // pred_fallthru
        _
    $region6: #{tpu_custom_call.1} parent=1 // loop_footer
      %s22 = sadd.s32 1, %s18
    $region7: #{tpu_custom_call.1} parent=1 // loop_footer_branch
      %17 = sbr.rel target = $region3
    $region8: #{tpu_custom_call.1} parent=1 // loop_exit
      _
    %1002 = vsyncpa [#allocation3], 1
    %s1003 = scalar_lea.sflag [#allocation3], 1
    %1004 = vsyncpa %s1003, 1
    %1005 = vsyncpa [#allocation6], 1
    %1006 = vsyncpa [#allocation4], 1
    %s1007 = scalar_lea.sflag [#allocation4], 1
    %1008 = vsyncpa %s1007, 1

</llo_original>
